<compile_context>
chip_gen: v5e
topology: v5e:2x2
jax: 0.10.0
libtpu: 0.0.40
codegen_flags: <defaults>
</compile_context>

<pallas_src>
import functools
import math

import jax
import jax.numpy as jnp
from jax.experimental import pallas as pl
from jax.experimental.pallas import tpu as pltpu

HIDDEN = 768
NUM_HEADS = 12
HEAD_DIM = 64
INTERMEDIATE = 3072
NUM_LAYERS = 2
VOCAB = 128
MAX_POS = 64
LN_EPS = 1e-12
DROP_P = 0.2
NUM_CLASSES = 2
CLS_PAD = 128  # pad classifier output to a full lane (avoids masked partial stores)

_VMEM = pl.BlockSpec(memory_space=pltpu.MemorySpace.VMEM)


# ---------------------------------------------------------------- shared in-kernel helpers
def _gelu(x):
    c = math.sqrt(2.0 / math.pi)
    return 0.5 * x * (1.0 + jnp.tanh(c * (x + 0.044715 * x * x * x)))


def _layernorm(x, g, b):
    mean = jnp.mean(x, axis=-1, keepdims=True)
    xc = x - mean
    var = jnp.mean(xc * xc, axis=-1, keepdims=True)
    return xc * jax.lax.rsqrt(var + LN_EPS) * g + b


# ---------------------------------------------------------------- embedding LayerNorm
def _ln_kernel(x_ref, g_ref, b_ref, o_ref):
    o_ref[...] = _layernorm(x_ref[...], g_ref[...], b_ref[...])


def layernorm(x, gamma, beta):
    M, H = x.shape
    return pl.pallas_call(
        _ln_kernel,
        out_shape=jax.ShapeDtypeStruct((M, H), jnp.float32),
        in_specs=[_VMEM, _VMEM, _VMEM],
        out_specs=_VMEM,
    )(x, gamma.reshape(1, H), beta.reshape(1, H))


# ------------------------------------------- fused QKV + multi-head attention + proj + LN
def _attn_block_kernel(x_ref, wqkv_ref, bqkv_ref, wo_ref, bo_ref, g_ref, be_ref, o_ref,
                       *, B, S):
    x = x_ref[...]                                                    # (M, 768) f32
    qkv = (
        jnp.dot(x.astype(jnp.bfloat16), wqkv_ref[...],
                preferred_element_type=jnp.float32)
        + bqkv_ref[...]
    )                                                                 # (M, 2304) f32
    qkv = qkv.reshape(B, S, 3 * HIDDEN).astype(jnp.bfloat16)          # (B, S, 2304)

    scale = 1.0 / math.sqrt(HEAD_DIM)
    ctx_parts = []
    for h in range(NUM_HEADS):                                        # unrolled at trace time
        lo = h * HEAD_DIM
        qh = qkv[:, :, lo:lo + HEAD_DIM]                              # (B, S, 64)
        kh = qkv[:, :, HIDDEN + lo:HIDDEN + lo + HEAD_DIM]
        vh = qkv[:, :, 2 * HIDDEN + lo:2 * HIDDEN + lo + HEAD_DIM]
        # contraction on the last dim of both q and k (no explicit k.T materialization)
        s = jnp.einsum("bqd,bkd->bqk", qh, kh,
                       preferred_element_type=jnp.float32) * scale    # (B, S, S) f32
        s = s - jnp.max(s, axis=-1, keepdims=True)
        p = jnp.exp(s)
        p = p / jnp.sum(p, axis=-1, keepdims=True)
        ctx_parts.append(
            jnp.einsum("bqk,bkd->bqd", p.astype(jnp.bfloat16), vh,
                       preferred_element_type=jnp.float32)
        )
    ctx = jnp.concatenate(ctx_parts, axis=-1).reshape(B * S, HIDDEN)  # (M, 768) f32

    attn = (
        jnp.dot(ctx.astype(jnp.bfloat16), wo_ref[...],
                preferred_element_type=jnp.float32)
        + bo_ref[...]
    )
    o_ref[...] = _layernorm(attn + x, g_ref[...], be_ref[...])


def attn_block(x, wqkv, bqkv, wo, bo, gamma, beta, B, S):
    M, H = x.shape
    return pl.pallas_call(
        functools.partial(_attn_block_kernel, B=B, S=S),
        out_shape=jax.ShapeDtypeStruct((M, H), jnp.float32),
        in_specs=[_VMEM] * 7,
        out_specs=_VMEM,
    )(x, wqkv, bqkv.reshape(1, -1), wo, bo.reshape(1, -1),
      gamma.reshape(1, H), beta.reshape(1, H))


# ------------------------------------------- fused FFN (w1 -> GELU -> w2) + residual + LN
def _ffn_block_kernel(x_ref, w1_ref, b1_ref, w2_ref, b2_ref, g_ref, be_ref, o_ref):
    x = x_ref[...]                                                    # (M, 768) f32
    h1 = (
        jnp.dot(x.astype(jnp.bfloat16), w1_ref[...],
                preferred_element_type=jnp.float32)
        + b1_ref[...]
    )                                                                 # (M, 3072) stays in VMEM
    h1 = _gelu(h1)
    h2 = (
        jnp.dot(h1.astype(jnp.bfloat16), w2_ref[...],
                preferred_element_type=jnp.float32)
        + b2_ref[...]
    )
    o_ref[...] = _layernorm(h2 + x, g_ref[...], be_ref[...])


def ffn_block(x, w1, b1, w2, b2, gamma, beta):
    M, H = x.shape
    return pl.pallas_call(
        _ffn_block_kernel,
        out_shape=jax.ShapeDtypeStruct((M, H), jnp.float32),
        in_specs=[_VMEM] * 7,
        out_specs=_VMEM,
    )(x, w1, b1.reshape(1, -1), w2, b2.reshape(1, -1),
      gamma.reshape(1, H), beta.reshape(1, H))


# ------------------------------- fused pooler (tanh) + Dropout(0.2) + Linear(768, 2 -> 128)
def _head_kernel(cls_ref, wp_ref, bp_ref, mask_ref, wc_ref, bc_ref, o_ref):
    pooled = jnp.tanh(
        jnp.dot(cls_ref[...].astype(jnp.bfloat16), wp_ref[...],
                preferred_element_type=jnp.float32)
        + bp_ref[...]
    )
    pooled = pooled * mask_ref[...]  # dropout keep-mask (all ones in eval), pre-scaled
    o_ref[...] = (
        jnp.dot(pooled.astype(jnp.bfloat16), wc_ref[...],
                preferred_element_type=jnp.float32)
        + bc_ref[...]
    )


def head(cls, w_pool, b_pool, mask, w_cls_pad, b_cls_pad):
    B = cls.shape[0]
    return pl.pallas_call(
        _head_kernel,
        out_shape=jax.ShapeDtypeStruct((B, CLS_PAD), jnp.float32),
        in_specs=[_VMEM] * 6,
        out_specs=_VMEM,
    )(cls, w_pool, b_pool.reshape(1, -1), mask, w_cls_pad, b_cls_pad.reshape(1, -1))


# ---------------------------------------------------------------- model glue (plain JAX)
def model_forward(params, token_ids, *, training=False, dropout_key=None):
    B, S = token_ids.shape
    M = B * S
    we = jnp.take(params["word_emb"], token_ids, axis=0)              # (B, S, H)
    pe = params["pos_emb"][:S][None, :, :]                            # (1, S, H)
    te = params["type_emb"][0][None, None, :]                         # (1, 1, H) token_type 0
    emb = (we + pe + te).astype(jnp.float32).reshape(M, HIDDEN)
    h = layernorm(emb, params["emb_ln_g"], params["emb_ln_b"])

    for p in params["layers"]:
        h = attn_block(h, p["wqkv"], p["bqkv"], p["wo"], p["bo"],
                       p["ln1_g"], p["ln1_b"], B, S)
        h = ffn_block(h, p["w1"], p["b1"], p["w2"], p["b2"],
                      p["ln2_g"], p["ln2_b"])

    cls = h.reshape(B, S, HIDDEN)[:, 0, :]                            # pooler uses [CLS] token
    if training:
        keep = (jax.random.uniform(dropout_key, (B, HIDDEN)) >= DROP_P).astype(jnp.float32)
        mask = keep * (1.0 / (1.0 - DROP_P))
    else:
        mask = jnp.ones((B, HIDDEN), jnp.float32)                     # nn.Dropout is identity in eval()

    logits_pad = head(cls, params["w_pool"], params["b_pool"], mask,
                      params["w_cls_pad"], params["b_cls_pad"])
    return logits_pad[:, :NUM_CLASSES]


def init_params(key):
    keys = iter(jax.random.split(key, 128))

    def nrm(shape, dtype=jnp.bfloat16):
        return (0.02 * jax.random.normal(next(keys), shape)).astype(dtype)

    def zeros(shape):
        return jnp.zeros(shape, jnp.float32)

    def ones(shape):
        return jnp.ones(shape, jnp.float32)

    layers = []
    for _ in range(NUM_LAYERS):
        layers.append(
            dict(
                wqkv=nrm((HIDDEN, 3 * HIDDEN)), bqkv=zeros((3 * HIDDEN,)),
                wo=nrm((HIDDEN, HIDDEN)), bo=zeros((HIDDEN,)),
                ln1_g=ones((HIDDEN,)), ln1_b=zeros((HIDDEN,)),
                w1=nrm((HIDDEN, INTERMEDIATE)), b1=zeros((INTERMEDIATE,)),
                w2=nrm((INTERMEDIATE, HIDDEN)), b2=zeros((HIDDEN,)),
                ln2_g=ones((HIDDEN,)), ln2_b=zeros((HIDDEN,)),
            )
        )

    # classifier weight/bias padded to a lane-dense 128 columns (only first 2 are real)
    w_cls = nrm((HIDDEN, NUM_CLASSES), dtype=jnp.float32)
    w_cls_pad = jnp.zeros((HIDDEN, CLS_PAD), jnp.float32).at[:, :NUM_CLASSES].set(w_cls)
    b_cls_pad = jnp.zeros((CLS_PAD,), jnp.float32)

    return dict(
        word_emb=nrm((VOCAB, HIDDEN), dtype=jnp.float32),
        pos_emb=nrm((MAX_POS, HIDDEN), dtype=jnp.float32),
        type_emb=nrm((2, HIDDEN), dtype=jnp.float32),
        emb_ln_g=ones((HIDDEN,)), emb_ln_b=zeros((HIDDEN,)),
        layers=layers,
        w_pool=nrm((HIDDEN, HIDDEN)), b_pool=zeros((HIDDEN,)),
        w_cls_pad=w_cls_pad.astype(jnp.bfloat16), b_cls_pad=b_cls_pad,
    )


if __name__ == "__main__":
    key = jax.random.PRNGKey(0)
    pkey, tkey = jax.random.split(key)
    params = init_params(pkey)

    B, S = 2, 8
    tokenized_text = jax.random.randint(tkey, (B, S), 0, VOCAB, dtype=jnp.int32)

    logits = model_forward(params, tokenized_text, training=False)
    logits = jax.block_until_ready(logits)
    assert logits.shape == (B, NUM_CLASSES) and logits.dtype == jnp.float32
    assert bool(jnp.all(jnp.isfinite(logits)))
    print("KERNEL_OK")
</pallas_src>

<mosaic_0001>
module attributes {stable_mosaic.version = 11 : i64} {
  func.func @_ln_kernel(%arg0: memref<16x768xf32, #tpu.memory_space<vmem>>, %arg1: memref<1x768xf32, #tpu.memory_space<vmem>>, %arg2: memref<1x768xf32, #tpu.memory_space<vmem>>, %arg3: memref<16x768xf32, #tpu.memory_space<vmem>>) attributes {dimension_semantics = [], scalar_prefetch = 0 : i64, scratch_operands = 0 : i64, tpu.core_type = #tpu.core_type<tc>} {
    %c0 = arith.constant 0 : index
    %c0_0 = arith.constant 0 : index
    %0 = vector.load %arg0[%c0, %c0_0] : memref<16x768xf32, #tpu.memory_space<vmem>>, vector<16x768xf32>
    %c0_1 = arith.constant 0 : index
    %c0_2 = arith.constant 0 : index
    %1 = vector.load %arg1[%c0_1, %c0_2] : memref<1x768xf32, #tpu.memory_space<vmem>>, vector<1x768xf32>
    %c0_3 = arith.constant 0 : index
    %c0_4 = arith.constant 0 : index
    %2 = vector.load %arg2[%c0_3, %c0_4] : memref<1x768xf32, #tpu.memory_space<vmem>>, vector<1x768xf32>
    %cst = arith.constant dense<0.000000e+00> : vector<16xf32>
    %3 = vector.multi_reduction <add>, %0, %cst [1] : vector<16x768xf32> to vector<16xf32>
    %4 = vector.shape_cast %3 : vector<16xf32> to vector<16x1xf32>
    %cst_5 = arith.constant 7.680000e+02 : f32
    %5 = vector.broadcast %cst_5 : f32 to vector<16x1xf32>
    %6 = arith.divf %4, %5 : vector<16x1xf32>
    %7 = vector.broadcast %6 : vector<16x1xf32> to vector<16x768xf32>
    %8 = arith.subf %0, %7 : vector<16x768xf32>
    %9 = arith.mulf %8, %8 : vector<16x768xf32>
    %cst_6 = arith.constant dense<0.000000e+00> : vector<16xf32>
    %10 = vector.multi_reduction <add>, %9, %cst_6 [1] : vector<16x768xf32> to vector<16xf32>
    %11 = vector.shape_cast %10 : vector<16xf32> to vector<16x1xf32>
    %cst_7 = arith.constant 7.680000e+02 : f32
    %12 = vector.broadcast %cst_7 : f32 to vector<16x1xf32>
    %13 = arith.divf %11, %12 : vector<16x1xf32>
    %cst_8 = arith.constant 9.99999996E-13 : f32
    %14 = vector.broadcast %cst_8 : f32 to vector<16x1xf32>
    %15 = arith.addf %13, %14 : vector<16x1xf32>
    %16 = math.rsqrt %15 : vector<16x1xf32>
    %17 = vector.broadcast %16 : vector<16x1xf32> to vector<16x768xf32>
    %18 = arith.mulf %8, %17 : vector<16x768xf32>
    %19 = vector.broadcast %1 : vector<1x768xf32> to vector<16x768xf32>
    %20 = arith.mulf %18, %19 : vector<16x768xf32>
    %21 = vector.broadcast %2 : vector<1x768xf32> to vector<16x768xf32>
    %22 = arith.addf %20, %21 : vector<16x768xf32>
    %c0_9 = arith.constant 0 : index
    %c0_10 = arith.constant 0 : index
    %23 = vector.load %arg3[%c0_9, %c0_10] : memref<16x768xf32, #tpu.memory_space<vmem>>, vector<16x768xf32>
    tpu.vector_store %arg3[%c0_9, %c0_10], %22 {strides = array<i32>} : memref<16x768xf32, #tpu.memory_space<vmem>>, vector<16x768xf32>,
    return
  }
}

</mosaic_0001>

<llo_original>
// kernel: tpu_custom_call.1
$region0: #{tpu_custom_call.1}
  #allocation0 [shape = 'u32[]', space=smem, size = 0x4, offset = 0x4, fixed_abs, tag = 'smem constant byte address 0x4 - core index']
  #allocation1 [shape = 'u32[72,128]{1,0:T(1,128)}', space=vmem, size = 0x9000, scoped, tag = 'internal scratch']
  %s0 = inlined_call_operand.hbm [shape: f32[16,768], index: 0, kind: input, shape index: {}]
  %s1 = inlined_call_operand.hbm [shape: f32[1,768], index: 1, kind: input, shape index: {}]
  %s2 = inlined_call_operand.hbm [shape: f32[1,768], index: 2, kind: input, shape index: {}]
  %s3 = inlined_call_operand.hbm [shape: f32[16,768], index: 3, kind: output, shape index: {}]
  %s4 = sld [smem:[#allocation0]]
  $region34: #{tpu_custom_call.1} parent=0
    _
  %s6 = ssub.s32 1, %s4
  %s7 = scalar_select 0, %s6, %s4
  $region1: #{tpu_custom_call.1} parent=0
    #allocation2 [shape = 'u8[49152]{0}', space=vmem, size = 0xc000, scoped, tag = 'input window, operand 0, single buffered']
    #allocation3 [shape = 's32[1]{0}', space=sflag, size = 0x4, scoped, tag = 'scoped memory for tpu_custom_call.1']
    #allocation4 [shape = 's32[1]{0}', space=sflag, size = 0x4, scoped, tag = 'scoped memory for tpu_custom_call.1']
    #allocation5 [shape = 'u8[3072]{0}', space=vmem, size = 0xc00, scoped, tag = 'input window, operand 1, single buffered']
    #allocation6 [shape = 's32[1]{0}', space=sflag, size = 0x4, scoped, tag = 'scoped memory for tpu_custom_call.1']
    #allocation7 [shape = 'u8[3072]{0}', space=vmem, size = 0xc00, scoped, tag = 'input window, operand 2, single buffered']
    #allocation8 [shape = 'u8[49152]{0}', space=vmem, size = 0xc000, scoped, tag = 'output window, operand 0, single buffered']
    %8 = vsyncpa [#allocation3], 0
    %9 = vsyncpa [#allocation6], 0
    %10 = vsyncpa [#allocation4], 0
    // Predicated region
    $region2: #{tpu_custom_call.1} parent=1 // pred_check
      _
    $region3: #{tpu_custom_call.1} parent=1 // pred_check_branch
      %12 = sbr.rel (0) target = $region5
    $region4: #{tpu_custom_call.1} parent=1 // pred_region
      %14 = vsyncadd [#allocation3], 0
      %s15 = sshll.u32 %s0, 4
      %s16 = int_to_ptr.hbm [resolvable:$true] %s15
      %s17 = sshll.u32 [#allocation2], 4
      %s18 = int_to_ptr.vmem [resolvable:$true] %s17
      %23 = dma.hbm_to_vmem [thread:$0]  %s16, 1536, %s18, [#allocation3], 768, 768, 48
    $region5: #{tpu_custom_call.1} parent=1 // pred_fallthru
      _
    // Predicated region
    $region6: #{tpu_custom_call.1} parent=1 // pred_check
      _
    $region7: #{tpu_custom_call.1} parent=1 // pred_check_branch
      %25 = sbr.rel (0) target = $region9
    $region8: #{tpu_custom_call.1} parent=1 // pred_region
      %27 = vsyncadd [#allocation6], 0
      %s29 = sshll.u32 %s1, 4
      %s30 = int_to_ptr.hbm [resolvable:$true] %s29
      %s31 = sshll.u32 [#allocation5], 4
      %s32 = int_to_ptr.vmem [resolvable:$true] %s31
      %34 = dma.hbm_to_vmem [thread:$0]  %s30, 96, %s32, [#allocation6]
    $region9: #{tpu_custom_call.1} parent=1 // pred_fallthru
      _
    // Predicated region
    $region10: #{tpu_custom_call.1} parent=1 // pred_check
      _
    $region11: #{tpu_custom_call.1} parent=1 // pred_check_branch
      %36 = sbr.rel (0) target = $region13
    $region12: #{tpu_custom_call.1} parent=1 // pred_region
      %38 = vsyncadd [#allocation6], 0
      %s40 = sshll.u32 %s2, 4
      %s41 = int_to_ptr.hbm [resolvable:$true] %s40
      %s42 = sshll.u32 [#allocation7], 4
      %s43 = int_to_ptr.vmem [resolvable:$true] %s42
      %45 = dma.hbm_to_vmem [thread:$0]  %s41, 96, %s43, [#allocation6]
    $region13: #{tpu_custom_call.1} parent=1 // pred_fallthru
      _
    // Predicated region
    $region14: #{tpu_custom_call.1} parent=1 // pred_check
      _
    $region15: #{tpu_custom_call.1} parent=1 // pred_check_branch
      %47 = sbr.rel (0) target = $region17
    $region16: #{tpu_custom_call.1} parent=1 // pred_region
      %49 = dma.done [#allocation3], 1536
    $region17: #{tpu_custom_call.1} parent=1 // pred_fallthru
      _
    // Predicated region
    $region18: #{tpu_custom_call.1} parent=1 // pred_check
      _
    $region19: #{tpu_custom_call.1} parent=1 // pred_check_branch
      %51 = sbr.rel (0) target = $region21
    $region20: #{tpu_custom_call.1} parent=1 // pred_region
      %53 = dma.done [#allocation6], 96
    $region21: #{tpu_custom_call.1} parent=1 // pred_fallthru
      _
    // Predicated region
    $region22: #{tpu_custom_call.1} parent=1 // pred_check
      _
    $region23: #{tpu_custom_call.1} parent=1 // pred_check_branch
      %55 = sbr.rel (0) target = $region25
    $region24: #{tpu_custom_call.1} parent=1 // pred_region
      %57 = dma.done [#allocation6], 96
    $region25: #{tpu_custom_call.1} parent=1 // pred_fallthru
      _
    %v58 = vld [vmem:[#allocation2] sm:$0xff]
    %v59 = vld [vmem:[#allocation2 + $0x8] sm:$0xff]
    %v60 = vld [vmem:[#allocation2 + $0x10] sm:$0xff]
    %v61 = vld [vmem:[#allocation2 + $0x18] sm:$0xff]
    %v62 = vld [vmem:[#allocation2 + $0x20] sm:$0xff]
    %v63 = vld [vmem:[#allocation2 + $0x28] sm:$0xff]
    %v64 = vld [vmem:[#allocation2 + $0x30] sm:$0xff]
    %v65 = vld [vmem:[#allocation2 + $0x38] sm:$0xff]
    %v66 = vld [vmem:[#allocation2 + $0x40] sm:$0xff]
    %v67 = vld [vmem:[#allocation2 + $0x48] sm:$0xff]
    %v68 = vld [vmem:[#allocation2 + $0x50] sm:$0xff]
    %v69 = vld [vmem:[#allocation2 + $0x58] sm:$0xff]
    %v70 = vld [vmem:[#allocation5] sm:$0x3f]
    %v71 = vld [vmem:[#allocation7] sm:$0x3f]
    %v72 = vadd.f32 %v58, %v59
    %v73 = vadd.f32 %v72, %v60
    %v74 = vadd.f32 %v73, %v61
    %v75 = vadd.f32 %v74, %v62
    %v76 = vadd.f32 %v75, %v63
    %77 = vadd.xlane.f32.xlu0 %v76
    %v78 = vpop.xlane.xlu0 %77
    %v79 = vadd.f32 %v64, %v65
    %v80 = vadd.f32 %v79, %v66
    %v81 = vadd.f32 %v80, %v67
    %v82 = vadd.f32 %v81, %v68
    %v83 = vadd.f32 %v82, %v69
    %84 = vadd.xlane.f32.xlu0 %v83
    %v85 = vpop.xlane.xlu0 %84
    %v86 = vrcp.pop 768.0
    %v87 = vmul.f32 768.0, %v86
    %v88 = vsub.f32 1.0, %v87
    %v89 = vmul.f32 %v86, %v88
    %v90 = vadd.f32 %v86, %v89
    %vm91 = vweird.f32 %v86
    %v92 = vsel %vm91, %v86, %v90
    %v93 = vmul.f32 %v78, %v92
    %v94 = vmul.f32 %v85, %v92
    %v95 = vsub.f32 %v58, %v93
    %v96 = vsub.f32 %v59, %v93
    %v97 = vsub.f32 %v60, %v93
    %v98 = vsub.f32 %v61, %v93
    %v99 = vsub.f32 %v62, %v93
    %v100 = vsub.f32 %v63, %v93
    %v101 = vsub.f32 %v64, %v94
    %v102 = vsub.f32 %v65, %v94
    %v103 = vsub.f32 %v66, %v94
    %v104 = vsub.f32 %v67, %v94
    %v105 = vsub.f32 %v68, %v94
    %v106 = vsub.f32 %v69, %v94
    %v107 = vmul.f32 %v95, %v95
    %v108 = vmul.f32 %v96, %v96
    %v109 = vmul.f32 %v97, %v97
    %v110 = vmul.f32 %v98, %v98
    %v111 = vmul.f32 %v99, %v99
    %v112 = vmul.f32 %v100, %v100
    %v113 = vmul.f32 %v101, %v101
    %v114 = vmul.f32 %v102, %v102
    %v115 = vmul.f32 %v103, %v103
    %v116 = vmul.f32 %v104, %v104
    %v117 = vmul.f32 %v105, %v105
    %v118 = vmul.f32 %v106, %v106
    %v119 = vadd.f32 %v107, %v108
    %v120 = vadd.f32 %v119, %v109
    %v121 = vadd.f32 %v120, %v110
    %v122 = vadd.f32 %v121, %v111
    %v123 = vadd.f32 %v122, %v112
    %124 = vadd.xlane.f32.xlu0 %v123
    %v125 = vpop.xlane.xlu0 %124
    %v126 = vadd.f32 %v113, %v114
    %v127 = vadd.f32 %v126, %v115
    %v128 = vadd.f32 %v127, %v116
    %v129 = vadd.f32 %v128, %v117
    %v130 = vadd.f32 %v129, %v118
    %131 = vadd.xlane.f32.xlu0 %v130
    %v132 = vpop.xlane.xlu0 %131
    %v133 = vmul.f32 %v125, %v92
    %v134 = vmul.f32 %v132, %v92
    %v135 = vadd.f32 %v133, 1e-12
    %v136 = vadd.f32 %v134, 1e-12
    %v137 = vrsqrt.pop %v135
    %v138 = vmul.f32 %v137, %v135
    %v139 = vmul.f32 %v138, %v137
    %v140 = vmul.f32 0.5, %v139
    %v141 = vsub.f32 1.5, %v140
    %v142 = vmul.f32 %v137, %v141
    %vm143 = vweird.f32 %v135
    %vm144 = vweird.f32 %v137
    %vm145 = vmor %vm143, %vm144
    %v146 = vsel %vm145, %v137, %v142
    %v147 = vrsqrt.pop %v136
    %v148 = vmul.f32 %v147, %v136
    %v149 = vmul.f32 %v148, %v147
    %v150 = vmul.f32 0.5, %v149
    %v151 = vsub.f32 1.5, %v150
    %v152 = vmul.f32 %v147, %v151
    %vm153 = vweird.f32 %v136
    %vm154 = vweird.f32 %v147
    %vm155 = vmor %vm153, %vm154
    %v156 = vsel %vm155, %v147, %v152
    %v157 = vmul.f32 %v95, %v146
    %v158 = vmul.f32 %v96, %v146
    %v159 = vmul.f32 %v97, %v146
    %v160 = vmul.f32 %v98, %v146
    %v161 = vmul.f32 %v99, %v146
    %v162 = vmul.f32 %v100, %v146
    %v163 = vmul.f32 %v101, %v156
    %v164 = vmul.f32 %v102, %v156
    %v165 = vmul.f32 %v103, %v156
    %v166 = vmul.f32 %v104, %v156
    %v167 = vmul.f32 %v105, %v156
    %v168 = vmul.f32 %v106, %v156
    %v170 = vperm.slane %v70, 0
    %v171 = vperm.slane %v70, 1
    %v172 = vperm.slane %v70, 2
    %v173 = vperm.slane %v70, 3
    %v174 = vperm.slane %v70, 4
    %v175 = vperm.slane %v70, 5
    %v182 = vmul.f32 %v157, %v170
    %v183 = vmul.f32 %v158, %v171
    %v184 = vmul.f32 %v159, %v172
    %v185 = vmul.f32 %v160, %v173
    %v186 = vmul.f32 %v161, %v174
    %v187 = vmul.f32 %v162, %v175
    %v188 = vmul.f32 %v163, %v170
    %v189 = vmul.f32 %v164, %v171
    %v190 = vmul.f32 %v165, %v172
    %v191 = vmul.f32 %v166, %v173
    %v192 = vmul.f32 %v167, %v174
    %v193 = vmul.f32 %v168, %v175
    %v195 = vperm.slane %v71, 0
    %v196 = vperm.slane %v71, 1
    %v197 = vperm.slane %v71, 2
    %v198 = vperm.slane %v71, 3
    %v199 = vperm.slane %v71, 4
    %v200 = vperm.slane %v71, 5
    %v207 = vadd.f32 %v182, %v195
    %v208 = vadd.f32 %v183, %v196
    %v209 = vadd.f32 %v184, %v197
    %v210 = vadd.f32 %v185, %v198
    %v211 = vadd.f32 %v186, %v199
    %v212 = vadd.f32 %v187, %v200
    %v213 = vadd.f32 %v188, %v195
    %v214 = vadd.f32 %v189, %v196
    %v215 = vadd.f32 %v190, %v197
    %v216 = vadd.f32 %v191, %v198
    %v217 = vadd.f32 %v192, %v199
    %v218 = vadd.f32 %v193, %v200
    %219 = vst [vmem:[#allocation8] sm:$0xff] %v207
    %220 = vst [vmem:[#allocation8 + $0x8] sm:$0xff] %v208
    %221 = vst [vmem:[#allocation8 + $0x10] sm:$0xff] %v209
    %222 = vst [vmem:[#allocation8 + $0x18] sm:$0xff] %v210
    %223 = vst [vmem:[#allocation8 + $0x20] sm:$0xff] %v211
    %224 = vst [vmem:[#allocation8 + $0x28] sm:$0xff] %v212
    %225 = vst [vmem:[#allocation8 + $0x30] sm:$0xff] %v213
    %226 = vst [vmem:[#allocation8 + $0x38] sm:$0xff] %v214
    %227 = vst [vmem:[#allocation8 + $0x40] sm:$0xff] %v215
    %228 = vst [vmem:[#allocation8 + $0x48] sm:$0xff] %v216
    %229 = vst [vmem:[#allocation8 + $0x50] sm:$0xff] %v217
    %230 = vst [vmem:[#allocation8 + $0x58] sm:$0xff] %v218
    // Predicated region
    $region26: #{tpu_custom_call.1} parent=1 // pred_check
      _
    $region27: #{tpu_custom_call.1} parent=1 // pred_check_branch
      %232 = sbr.rel (0) target = $region29
    $region28: #{tpu_custom_call.1} parent=1 // pred_region
      %234 = vsyncadd [#allocation4], 0
      %s235 = sshll.u32 [#allocation8], 4
      %s236 = int_to_ptr.vmem [resolvable:$true] %s235
      %s237 = sshll.u32 %s3, 4
      %s238 = int_to_ptr.hbm [resolvable:$true] %s237
      %243 = dma.vmem_to_hbm [thread:$0]  %s236, 1536, %s238, [#allocation4], 768, 768, 48
    $region29: #{tpu_custom_call.1} parent=1 // pred_fallthru
      _
    // Predicated region
    $region30: #{tpu_custom_call.1} parent=1 // pred_check
      _
    $region31: #{tpu_custom_call.1} parent=1 // pred_check_branch
      %245 = sbr.rel (0) target = $region33
    $region32: #{tpu_custom_call.1} parent=1 // pred_region
      %247 = dma.done [#allocation4], 1536
    $region33: #{tpu_custom_call.1} parent=1 // pred_fallthru
      _
    %248 = vsyncpa [#allocation3], 1
    %249 = vsyncpa [#allocation6], 1
    %250 = vsyncpa [#allocation4], 1

</llo_original>
